<compile_context>
chip_gen: v7x
topology: tpu7x:2x2x1
jax: 0.10.0
libtpu: 0.0.40
codegen_flags: <defaults>
</compile_context>

<pallas_src>
import math

import numpy as np

import jax
import jax.numpy as jnp
from jax import lax
from jax.experimental import pallas as pl
from jax.experimental.pallas import tpu as pltpu

# ----------------- hyper-parameters (structurally consistent with the module) -----------------
BATCH = 2
NUM_POINTS = 32          # n
EMBED_DIM = 32           # must equal NUM_POINTS so in_dim == 5 * embed_dim (as in the module)
HIDDEN_DIM = 64
NUM_LAYERS = 3
NUM_GAUSSIANS = 8
MAX_PERIOD = 10000.0     # diffusers Timesteps default
DOWNSCALE_FREQ_SHIFT = 1.0

# the module's in_dim = embed_dim * 5 only matches cat([t_emb, pc, seg]) when embed_dim == num_points
assert EMBED_DIM == NUM_POINTS, "module requires embed_dim == num_points (in_dim = 5 * embed_dim)"
assert EMBED_DIM % 8 == 0 and HIDDEN_DIM % 8 == 0

IN_DIM = 5 * EMBED_DIM                    # 160 = E + 3N + N
GN = NUM_GAUSSIANS * NUM_POINTS           # 256


def _rup(x, m):
    return (x + m - 1) // m * m


# fused, lane-dense output layout (all offsets 128-aligned -> unmasked stores)
LW_OFF = _rup(GN, 128)                    # 256
LS_OFF = LW_OFF + 128                     # 384
OUT_W = LS_OFF + 128                      # 512

# packed hidden-buffer row offsets (weight rows, then an 8-row bias block per layer; all %8==0)
_LAYER_OFFS = []                          # (w_row_off, w_rows, b_row_off)
_off = 0
_in = IN_DIM
for _ in range(NUM_LAYERS):
    _LAYER_OFFS.append((_off, _in, _off + _in))
    _off += _in + 8
    _in = HIDDEN_DIM
FREQ_OFF = _off                           # constant sinusoidal freq table row block
P_HIDDEN_ROWS = _off + 8                  # 320 for the defaults above


# ----------------------------------- Pallas kernel -----------------------------------
def _denoiser_kernel(data_ref, ph_ref, phd_ref, out_ref):
    """data: (B, 4N+1) = [pc | seg | t]; ph: (P_HIDDEN_ROWS, H); phd: (H+8, OUT_W)."""
    # --- sinusoidal time embedding (flip_sin_to_cos=True -> [cos | sin]) ---
    # freqs were precomputed at pack time (no in-kernel exp); only cos/sin stay on the EUP.
    freqs = ph_ref[FREQ_OFF:FREQ_OFF + 1, 0:EMBED_DIM]                 # (1, E)
    t = data_ref[:, 4 * NUM_POINTS:4 * NUM_POINTS + 1]                 # (B, 1)
    ang = t * freqs                                                    # (B, E)
    j = lax.broadcasted_iota(jnp.int32, (1, EMBED_DIM), 1)
    t_emb = jnp.where(j < EMBED_DIM // 2, jnp.cos(ang), jnp.sin(ang))  # (B, E)

    # --- first Linear: cat([t_emb, pc, seg]) @ W0 as split matmuls (pc|seg packed contiguously) ---
    x_ps = data_ref[:, 0:4 * NUM_POINTS]                               # (B, 4N) = [pc | seg]
    w_off, w_rows, b_off = _LAYER_OFFS[0]
    w0_t = ph_ref[w_off:w_off + EMBED_DIM, :]                          # rows for t_emb
    w0_ps = ph_ref[w_off + EMBED_DIM:w_off + w_rows, :]                # rows for [pc | seg]
    x = (jnp.dot(t_emb, w0_t, preferred_element_type=jnp.float32)
         + jnp.dot(x_ps, w0_ps, preferred_element_type=jnp.float32)
         + ph_ref[b_off:b_off + 1, :])
    x = x * jax.nn.sigmoid(x)                                          # SiLU

    # --- remaining MLP layers ---
    for l in range(1, NUM_LAYERS):
        w_off, w_rows, b_off = _LAYER_OFFS[l]
        x = (jnp.dot(x, ph_ref[w_off:w_off + w_rows, :],
                     preferred_element_type=jnp.float32)
             + ph_ref[b_off:b_off + 1, :])
        x = x * jax.nn.sigmoid(x)                                      # SiLU

    # --- fused heads: single (H, OUT_W) matmul, single lane-dense store ---
    y = (jnp.dot(x, phd_ref[0:HIDDEN_DIM, :], preferred_element_type=jnp.float32)
         + phd_ref[HIDDEN_DIM:HIDDEN_DIM + 1, :])                      # (B, OUT_W)

    # masked log_softmax over the logweights lanes only; all other lanes pass through.
    lane = lax.broadcasted_iota(jnp.int32, (1, OUT_W), 1)
    is_lw = jnp.logical_and(lane >= LW_OFF, lane < LW_OFF + NUM_GAUSSIANS)
    y_lw = jnp.where(is_lw, y, -jnp.inf)
    m = jnp.max(y_lw, axis=-1, keepdims=True)
    denom = jnp.sum(jnp.exp(y_lw - m), axis=-1, keepdims=True)         # exp(-inf)=0 outside
    out_ref[...] = jnp.where(is_lw, y - m - jnp.log(denom), y)


# ----------------------------------- parameter packing (once, outside the hot path) -----------------------------------
def pack_params(params):
    """Pack all weights/biases (+ constant freq table) into two f32 buffers."""
    blocks = []
    for (w, b) in params["mlp"]:
        blocks.append(jnp.asarray(w, jnp.float32))
        brow = jnp.zeros((8, HIDDEN_DIM), jnp.float32)
        blocks.append(brow.at[0, :].set(jnp.asarray(b, jnp.float32).reshape(-1)))

    # constant sinusoidal freq table, flip_sin_to_cos layout: [cos-half | sin-half] share freqs
    half = EMBED_DIM // 2
    k = np.arange(half, dtype=np.float64)
    fr = np.exp(-math.log(MAX_PERIOD) * k / (half - DOWNSCALE_FREQ_SHIFT)).astype(np.float32)
    fr_full = np.concatenate([fr, fr])
    frow = jnp.zeros((8, HIDDEN_DIM), jnp.float32).at[0, :EMBED_DIM].set(jnp.asarray(fr_full))
    blocks.append(frow)
    p_hidden = jnp.concatenate(blocks, axis=0)
    assert p_hidden.shape == (P_HIDDEN_ROWS, HIDDEN_DIM)

    wm, bm = params["out_means"]
    wlw, blw = params["out_logweights"]
    wls, bls = params["out_logstds"]
    w_head = jnp.zeros((HIDDEN_DIM, OUT_W), jnp.float32)
    w_head = (w_head.at[:, :GN].set(wm)
                    .at[:, LW_OFF:LW_OFF + NUM_GAUSSIANS].set(wlw)
                    .at[:, LS_OFF:LS_OFF + 1].set(wls))
    b_head = jnp.zeros((8, OUT_W), jnp.float32)
    b_head = (b_head.at[0, :GN].set(bm.reshape(-1))
                    .at[0, LW_OFF:LW_OFF + NUM_GAUSSIANS].set(blw.reshape(-1))
                    .at[0, LS_OFF:LS_OFF + 1].set(bls.reshape(-1)))
    p_head = jnp.concatenate([w_head, b_head], axis=0)                 # (H+8, OUT_W)
    return p_hidden, p_head


# ----------------------------------- wrapper (glue) -----------------------------------
def gmflow_mlp_label_denoiser(seg, timestep, pc, packed_params):
    """seg: (B, N, 1, 1, 1); timestep: (B,); pc: (B, N, 3, 1, 1).

    Note: the PyTorch docstring says timestep is (B, N), but diffusers' Timesteps
    needs a 1-D input and the concat implies t_emb has shape (B, embed_dim),
    so timestep is treated as (B,).
    """
    p_hidden, p_head = packed_params
    bs, n = seg.shape[0], seg.shape[1]
    extra_dims = seg.shape[3:]                                         # (1, 1)
    assert n == NUM_POINTS

    # single lane-dense data operand: [pc | seg | t]  (concat order matches the w0 split in-kernel)
    data = jnp.concatenate(
        [pc.reshape(bs, n * 3).astype(jnp.float32),
         seg.reshape(bs, n).astype(jnp.float32),
         timestep.reshape(bs, 1).astype(jnp.float32)], axis=-1)        # (B, 4N+1)

    vmem = pl.BlockSpec(memory_space=pltpu.MemorySpace.VMEM)
    flops = 2 * bs * (IN_DIM * HIDDEN_DIM
                      + (NUM_LAYERS - 1) * HIDDEN_DIM * HIDDEN_DIM
                      + HIDDEN_DIM * OUT_W)
    transcendentals = bs * (EMBED_DIM + NUM_LAYERS * HIDDEN_DIM + OUT_W + 1)
    bytes_accessed = 4 * (data.size + p_hidden.size + p_head.size + bs * OUT_W)

    out = pl.pallas_call(
        _denoiser_kernel,
        out_shape=jax.ShapeDtypeStruct((bs, OUT_W), jnp.float32),
        in_specs=[vmem, vmem, vmem],
        out_specs=vmem,
        cost_estimate=pl.CostEstimate(flops=flops,
                                      transcendentals=transcendentals,
                                      bytes_accessed=bytes_accessed),
    )(data, p_hidden, p_head)

    means = out[:, :GN].reshape(bs, NUM_GAUSSIANS, n, 1, *extra_dims)
    logweights = out[:, LW_OFF:LW_OFF + NUM_GAUSSIANS].reshape(bs, NUM_GAUSSIANS, 1, 1, *extra_dims)
    logstds = out[:, LS_OFF:LS_OFF + 1].reshape(bs, 1, 1, 1, *extra_dims)
    return dict(means=means, logweights=logweights, logstds=logstds)


# ----------------------------------- params -----------------------------------
def init_params(key, *, randomize_all=False):
    """randomize_all=False mirrors the module's init_weights() (kaiming fan_in weights,
    zero biases, zeroed out_logweights/out_logstds weights). randomize_all=True makes
    every weight/bias non-zero so packed bias rows + fused-head lanes are exercised."""
    def kaiming(k, shape):       # fan_in = shape[0]; weights stored as (in, out) == PyTorch W.T
        return jax.random.normal(k, shape, jnp.float32) * math.sqrt(2.0 / shape[0])

    def bias(k, nfeat):
        if randomize_all:
            return 0.1 * jax.random.normal(k, (1, nfeat), jnp.float32)
        return jnp.zeros((1, nfeat), jnp.float32)

    params = {"mlp": []}
    in_dim = IN_DIM
    for _ in range(NUM_LAYERS):
        key, kw, kb = jax.random.split(key, 3)
        params["mlp"].append((kaiming(kw, (in_dim, HIDDEN_DIM)), bias(kb, HIDDEN_DIM)))
        in_dim = HIDDEN_DIM

    key, kw, kb = jax.random.split(key, 3)
    params["out_means"] = (kaiming(kw, (HIDDEN_DIM, GN)), bias(kb, GN))

    key, kw, kb = jax.random.split(key, 3)
    wlw = kaiming(kw, (HIDDEN_DIM, NUM_GAUSSIANS)) if randomize_all \
        else jnp.zeros((HIDDEN_DIM, NUM_GAUSSIANS), jnp.float32)
    params["out_logweights"] = (wlw, bias(kb, NUM_GAUSSIANS))

    key, kw, kb = jax.random.split(key, 3)
    wls = kaiming(kw, (HIDDEN_DIM, 1)) if randomize_all else jnp.zeros((HIDDEN_DIM, 1), jnp.float32)
    params["out_logstds"] = (wls, bias(kb, 1))
    return params


# ----------------------------------- pure-JAX reference (for verification) -----------------------------------
def reference_forward(seg, timestep, pc, params):
    bs, n = seg.shape[0], seg.shape[1]
    extra_dims = seg.shape[3:]
    half = EMBED_DIM // 2
    kk = jnp.arange(half, dtype=jnp.float32)
    freqs = jnp.exp(-math.log(MAX_PERIOD) * kk / (half - DOWNSCALE_FREQ_SHIFT))
    ang = timestep.astype(jnp.float32)[:, None] * freqs[None, :]
    emb = jnp.concatenate([jnp.sin(ang), jnp.cos(ang)], axis=-1)
    t_emb = jnp.concatenate([emb[:, half:], emb[:, :half]], axis=-1)   # flip_sin_to_cos

    x = jnp.concatenate([t_emb, pc.reshape(bs, n * 3), seg.reshape(bs, n)], axis=-1)
    for w, b in params["mlp"]:
        x = x @ w + b
        x = x * jax.nn.sigmoid(x)
    means = x @ params["out_means"][0] + params["out_means"][1]
    lw = x @ params["out_logweights"][0] + params["out_logweights"][1]
    lw = jax.nn.log_softmax(lw, axis=-1)
    ls = x @ params["out_logstds"][0] + params["out_logstds"][1]
    return dict(means=means.reshape(bs, NUM_GAUSSIANS, n, 1, *extra_dims),
                logweights=lw.reshape(bs, NUM_GAUSSIANS, 1, 1, *extra_dims),
                logstds=ls.reshape(bs, 1, 1, 1, *extra_dims))


if __name__ == "__main__":
    key = jax.random.PRNGKey(0)
    k_seg, k_pc, k_t, k_p1, k_p2 = jax.random.split(key, 5)
    seg = jax.random.normal(k_seg, (BATCH, NUM_POINTS, 1, 1, 1), jnp.float32)
    pc = jax.random.normal(k_pc, (BATCH, NUM_POINTS, 3, 1, 1), jnp.float32)
    timestep = jax.random.uniform(k_t, (BATCH,), jnp.float32, 0.0, 1000.0)

    # case 1: mirrors the module's init_weights(); case 2: fully randomized params so the
    # packed bias rows, fused-head lanes and masked log_softmax are genuinely exercised.
    cases = [init_params(k_p1, randomize_all=False),
             init_params(k_p2, randomize_all=True)]

    for params in cases:
        packed = pack_params(params)                      # done once per parameter set
        out = jax.block_until_ready(gmflow_mlp_label_denoiser(seg, timestep, pc, packed))
        ref = reference_forward(seg, timestep, pc, params)

        assert out["means"].shape == (BATCH, NUM_GAUSSIANS, NUM_POINTS, 1, 1, 1)
        assert out["logweights"].shape == (BATCH, NUM_GAUSSIANS, 1, 1, 1, 1)
        assert out["logstds"].shape == (BATCH, 1, 1, 1, 1, 1)
        for name in ("means", "logweights", "logstds"):
            assert jnp.allclose(out[name], ref[name], rtol=1e-4, atol=2e-4), name

    print("KERNEL_OK")
</pallas_src>

<mosaic_0001>
module attributes {stable_mosaic.version = 11 : i64} {
  func.func @_denoiser_kernel(%arg0: memref<2x129xf32, #tpu.memory_space<vmem>>, %arg1: memref<320x64xf32, #tpu.memory_space<vmem>>, %arg2: memref<72x512xf32, #tpu.memory_space<vmem>>, %arg3: memref<2x512xf32, #tpu.memory_space<vmem>>) attributes {dimension_semantics = [], scalar_prefetch = 0 : i64, scratch_operands = 0 : i64, tpu.core_type = #tpu.core_type<tc>} {
    %c312 = arith.constant 312 : index
    %c0 = arith.constant 0 : index
    %0 = vector.load %arg1[%c312, %c0] : memref<320x64xf32, #tpu.memory_space<vmem>>, vector<1x32xf32>
    %c0_0 = arith.constant 0 : index
    %c128 = arith.constant 128 : index
    %1 = vector.load %arg0[%c0_0, %c128] : memref<2x129xf32, #tpu.memory_space<vmem>>, vector<2x1xf32>
    %2 = vector.broadcast %1 : vector<2x1xf32> to vector<2x32xf32>
    %3 = vector.broadcast %0 : vector<1x32xf32> to vector<2x32xf32>
    %4 = arith.mulf %2, %3 : vector<2x32xf32>
    %5 = tpu.iota {dimensions = array<i32: 1>} : vector<1x32xi32>
    %c16_i32 = arith.constant 16 : i32
    %6 = vector.broadcast %c16_i32 : i32 to vector<1x32xi32>
    %7 = arith.cmpi slt, %5, %6 : vector<1x32xi32>
    %8 = math.cos %4 : vector<2x32xf32>
    %9 = math.sin %4 : vector<2x32xf32>
    %10 = vector.shape_cast %7 : vector<1x32xi1> to vector<1x32xi1>
    %11 = vector.broadcast %10 : vector<1x32xi1> to vector<2x32xi1>
    %12 = arith.select %11, %8, %9 : vector<2x32xi1>, vector<2x32xf32>
    %c0_1 = arith.constant 0 : index
    %c0_2 = arith.constant 0 : index
    %13 = vector.load %arg0[%c0_1, %c0_2] : memref<2x129xf32, #tpu.memory_space<vmem>>, vector<2x128xf32>
    %c0_3 = arith.constant 0 : index
    %c0_4 = arith.constant 0 : index
    %14 = vector.load %arg1[%c0_3, %c0_4] : memref<320x64xf32, #tpu.memory_space<vmem>>, vector<32x64xf32>
    %c32 = arith.constant 32 : index
    %c0_5 = arith.constant 0 : index
    %15 = vector.load %arg1[%c32, %c0_5] : memref<320x64xf32, #tpu.memory_space<vmem>>, vector<128x64xf32>
    %cst = arith.constant dense<0.000000e+00> : vector<2x64xf32>
    %16 = tpu.matmul %12, %14, %cst {dimension_numbers = #tpu.dot_dimension_numbers<[1], [0], [0], [1], [0, 0, 1, 1], [], []>} : vector<2x32xf32>, vector<32x64xf32>, vector<2x64xf32> -> vector<2x64xf32>
    %cst_6 = arith.constant dense<0.000000e+00> : vector<2x64xf32>
    %17 = tpu.matmul %13, %15, %cst_6 {dimension_numbers = #tpu.dot_dimension_numbers<[1], [0], [0], [1], [0, 0, 1, 1], [], []>} : vector<2x128xf32>, vector<128x64xf32>, vector<2x64xf32> -> vector<2x64xf32>
    %18 = arith.addf %16, %17 : vector<2x64xf32>
    %c160 = arith.constant 160 : index
    %c0_7 = arith.constant 0 : index
    %19 = vector.load %arg1[%c160, %c0_7] : memref<320x64xf32, #tpu.memory_space<vmem>>, vector<1x64xf32>
    %20 = vector.broadcast %19 : vector<1x64xf32> to vector<2x64xf32>
    %21 = arith.addf %18, %20 : vector<2x64xf32>
    %22 = arith.negf %21 : vector<2x64xf32>
    %23 = math.exp %22 : vector<2x64xf32>
    %cst_8 = arith.constant 1.000000e+00 : f32
    %24 = vector.broadcast %cst_8 : f32 to vector<2x64xf32>
    %25 = arith.addf %24, %23 : vector<2x64xf32>
    %26 = arith.divf %24, %25 : vector<2x64xf32>
    %27 = arith.mulf %21, %26 : vector<2x64xf32>
    %c168 = arith.constant 168 : index
    %c0_9 = arith.constant 0 : index
    %28 = vector.load %arg1[%c168, %c0_9] : memref<320x64xf32, #tpu.memory_space<vmem>>, vector<64x64xf32>
    %cst_10 = arith.constant dense<0.000000e+00> : vector<2x64xf32>
    %29 = tpu.matmul %27, %28, %cst_10 {dimension_numbers = #tpu.dot_dimension_numbers<[1], [0], [0], [1], [0, 0, 1, 1], [], []>} : vector<2x64xf32>, vector<64x64xf32>, vector<2x64xf32> -> vector<2x64xf32>
    %c232 = arith.constant 232 : index
    %c0_11 = arith.constant 0 : index
    %30 = vector.load %arg1[%c232, %c0_11] : memref<320x64xf32, #tpu.memory_space<vmem>>, vector<1x64xf32>
    %31 = vector.broadcast %30 : vector<1x64xf32> to vector<2x64xf32>
    %32 = arith.addf %29, %31 : vector<2x64xf32>
    %33 = arith.negf %32 : vector<2x64xf32>
    %34 = math.exp %33 : vector<2x64xf32>
    %cst_12 = arith.constant 1.000000e+00 : f32
    %35 = vector.broadcast %cst_12 : f32 to vector<2x64xf32>
    %36 = arith.addf %35, %34 : vector<2x64xf32>
    %37 = arith.divf %35, %36 : vector<2x64xf32>
    %38 = arith.mulf %32, %37 : vector<2x64xf32>
    %c240 = arith.constant 240 : index
    %c0_13 = arith.constant 0 : index
    %39 = vector.load %arg1[%c240, %c0_13] : memref<320x64xf32, #tpu.memory_space<vmem>>, vector<64x64xf32>
    %cst_14 = arith.constant dense<0.000000e+00> : vector<2x64xf32>
    %40 = tpu.matmul %38, %39, %cst_14 {dimension_numbers = #tpu.dot_dimension_numbers<[1], [0], [0], [1], [0, 0, 1, 1], [], []>} : vector<2x64xf32>, vector<64x64xf32>, vector<2x64xf32> -> vector<2x64xf32>
    %c304 = arith.constant 304 : index
    %c0_15 = arith.constant 0 : index
    %41 = vector.load %arg1[%c304, %c0_15] : memref<320x64xf32, #tpu.memory_space<vmem>>, vector<1x64xf32>
    %42 = vector.broadcast %41 : vector<1x64xf32> to vector<2x64xf32>
    %43 = arith.addf %40, %42 : vector<2x64xf32>
    %44 = arith.negf %43 : vector<2x64xf32>
    %45 = math.exp %44 : vector<2x64xf32>
    %cst_16 = arith.constant 1.000000e+00 : f32
    %46 = vector.broadcast %cst_16 : f32 to vector<2x64xf32>
    %47 = arith.addf %46, %45 : vector<2x64xf32>
    %48 = arith.divf %46, %47 : vector<2x64xf32>
    %49 = arith.mulf %43, %48 : vector<2x64xf32>
    %c0_17 = arith.constant 0 : index
    %c0_18 = arith.constant 0 : index
    %50 = vector.load %arg2[%c0_17, %c0_18] : memref<72x512xf32, #tpu.memory_space<vmem>>, vector<64x512xf32>
    %cst_19 = arith.constant dense<0.000000e+00> : vector<2x512xf32>
    %51 = tpu.matmul %49, %50, %cst_19 {dimension_numbers = #tpu.dot_dimension_numbers<[1], [0], [0], [1], [0, 0, 1, 1], [], []>} : vector<2x64xf32>, vector<64x512xf32>, vector<2x512xf32> -> vector<2x512xf32>
    %c64 = arith.constant 64 : index
    %c0_20 = arith.constant 0 : index
    %52 = vector.load %arg2[%c64, %c0_20] : memref<72x512xf32, #tpu.memory_space<vmem>>, vector<1x512xf32>
    %53 = vector.broadcast %52 : vector<1x512xf32> to vector<2x512xf32>
    %54 = arith.addf %51, %53 : vector<2x512xf32>
    %55 = tpu.iota {dimensions = array<i32: 1>} : vector<1x512xi32>
    %c256_i32 = arith.constant 256 : i32
    %56 = vector.broadcast %c256_i32 : i32 to vector<1x512xi32>
    %57 = arith.cmpi sge, %55, %56 : vector<1x512xi32>
    %c264_i32 = arith.constant 264 : i32
    %58 = vector.broadcast %c264_i32 : i32 to vector<1x512xi32>
    %59 = arith.cmpi slt, %55, %58 : vector<1x512xi32>
    %60 = arith.andi %57, %59 : vector<1x512xi1>
    %cst_21 = arith.constant 0xFF800000 : f32
    %61 = vector.shape_cast %60 : vector<1x512xi1> to vector<1x512xi1>
    %62 = vector.broadcast %61 : vector<1x512xi1> to vector<2x512xi1>
    %63 = vector.broadcast %cst_21 : f32 to vector<2x512xf32>
    %64 = arith.select %62, %54, %63 : vector<2x512xi1>, vector<2x512xf32>
    %cst_22 = arith.constant dense<0xFF800000> : vector<2xf32>
    %65 = vector.multi_reduction <maximumf>, %64, %cst_22 [1] : vector<2x512xf32> to vector<2xf32>
    %66 = vector.shape_cast %65 : vector<2xf32> to vector<2x1xf32>
    %67 = vector.broadcast %66 : vector<2x1xf32> to vector<2x512xf32>
    %68 = arith.subf %64, %67 : vector<2x512xf32>
    %69 = math.exp %68 : vector<2x512xf32>
    %cst_23 = arith.constant dense<0.000000e+00> : vector<2xf32>
    %70 = vector.multi_reduction <add>, %69, %cst_23 [1] : vector<2x512xf32> to vector<2xf32>
    %71 = vector.shape_cast %70 : vector<2xf32> to vector<2x1xf32>
    %72 = vector.broadcast %66 : vector<2x1xf32> to vector<2x512xf32>
    %73 = arith.subf %54, %72 : vector<2x512xf32>
    %74 = math.log %71 : vector<2x1xf32>
    %75 = vector.broadcast %74 : vector<2x1xf32> to vector<2x512xf32>
    %76 = arith.subf %73, %75 : vector<2x512xf32>
    %77 = vector.shape_cast %60 : vector<1x512xi1> to vector<1x512xi1>
    %78 = vector.broadcast %77 : vector<1x512xi1> to vector<2x512xi1>
    %79 = arith.select %78, %76, %54 : vector<2x512xi1>, vector<2x512xf32>
    %c0_24 = arith.constant 0 : index
    %c0_25 = arith.constant 0 : index
    %80 = vector.load %arg3[%c0_24, %c0_25] : memref<2x512xf32, #tpu.memory_space<vmem>>, vector<2x512xf32>
    tpu.vector_store %arg3[%c0_24, %c0_25], %79 {strides = array<i32>} : memref<2x512xf32, #tpu.memory_space<vmem>>, vector<2x512xf32>,
    return
  }
}

</mosaic_0001>

<llo_original>
// kernel: tpu_custom_call.1
$region0: #{tpu_custom_call.1}
  #allocation0 [shape = 'u32[]', space=smem, size = 0x4, offset = 0x4, fixed_abs, tag = 'smem constant byte address 0x4 - core index']
  #allocation1 [shape = 'u32[144,128]{1,0:T(1,128)}', space=vmem, size = 0x12000, scoped, tag = 'internal scratch']
  %s0 = inlined_call_operand.vmem [shape: f32[2,129], index: 0, kind: input, shape index: {}]
  %s1 = inlined_call_operand.vmem [shape: f32[320,64], index: 1, kind: input, shape index: {}]
  %s2 = inlined_call_operand.vmem [shape: f32[72,512], index: 2, kind: input, shape index: {}]
  %s3 = inlined_call_operand.hbm [shape: f32[2,512], index: 3, kind: output, shape index: {}]
  %s4 = sld [smem:[#allocation0]]
  $region22: #{tpu_custom_call.1} parent=0
    _
  %s6 = ssub.s32 1, %s4
  %s7 = scalar_select 0, %s6, %s4
  $region1: #{tpu_custom_call.1} parent=0
    #allocation2 [shape = 'u8[4096]{0}', space=vmem, size = 0x1000, scoped, tag = 'output window, operand 0, single buffered']
    #allocation3 [shape = 's32[1]{0}', space=sflag, size = 0x4, scoped, tag = 'scoped memory for tpu_custom_call.1']
    %8 = vsyncpa [#allocation3], 0
    // Predicated region
    $region2: #{tpu_custom_call.1} parent=1 // pred_check
      _
    $region3: #{tpu_custom_call.1} parent=1 // pred_check_branch
      %10 = sbr.rel (0) target = $region5
    $region4: #{tpu_custom_call.1} parent=1 // pred_region
      _
    $region5: #{tpu_custom_call.1} parent=1 // pred_fallthru
      _
    // Predicated region
    $region6: #{tpu_custom_call.1} parent=1 // pred_check
      _
    $region7: #{tpu_custom_call.1} parent=1 // pred_check_branch
      %12 = sbr.rel (0) target = $region9
    $region8: #{tpu_custom_call.1} parent=1 // pred_region
      _
    $region9: #{tpu_custom_call.1} parent=1 // pred_fallthru
      _
    // Predicated region
    $region10: #{tpu_custom_call.1} parent=1 // pred_check
      _
    $region11: #{tpu_custom_call.1} parent=1 // pred_check_branch
      %14 = sbr.rel (0) target = $region13
    $region12: #{tpu_custom_call.1} parent=1 // pred_region
      _
    $region13: #{tpu_custom_call.1} parent=1 // pred_fallthru
      _
    %v15 = vld [vmem:[%s1 + $0x138] sm:$0x1]
    %v16 = vld [vmem:[%s0 + $0x2] sm:$0x3]
    %18 = vset.pattern.permute.xlu0 0
    %19 = vperm.xlu0 %18, %v16
    %v20 = vpop.permute.xlu0 %19
    %v23 = vunpack.c.l.s4 269488144
    %v24 = vunpack.c.0.s8 %v23
    %v25 = vlaneseq
    %v26 = vshrl.u32 %v25, 7
    %v27 = vsub.s32 %v24, %v26
    %v28 = vrot.slane %v20, %v27
    %v29 = vlaneseq
    %v30 = vshrl.u32 %v29, 7
    %v31 = vsub.s32 0, %v30
    %v32 = vrot.slane %v15, %v31
    %v33 = vmul.f32 %v28, %v32
    %v34 = vlaneseq
    %v35 = vand.u32 %v34, 127
    %vm36 = vcmp.lt.s32.totalorder %v35, 16
    %v37 = vand.u32 2147483647, %v33
    %vm38 = vcmp.le.f32.partialorder %v37, 0.7853982
    %vm39 = vcmp.lt.s32.totalorder %v33, 0
    %v40 = vand.u32 %v33, 2139095040
    %v41 = vshrl.u32 %v40, 23
    %v42 = vsub.s32 %v41, 127
    %v43 = vand.u32 2147483647, %v33
    %v44 = vand.u32 %v43, 8388607
    %v45 = vor.u32 %v44, 8388608
    %v46 = vsub.s32 0, %v45
    %v47 = vadd.s32 %v42, 1
    %vm48 = vcmp.gt.s32.totalorder %v47, 0
    %v49 = vsel %vm48, %v47, 0
    %v50 = vshrl.u32 %v49, 5
    %v51 = vand.u32 %v49, 31
    %v52 = vsub.s32 32, %v51
    %v53 = vshrl.u32 683565275, %v52
    %v54 = vshll.u32 683565275, %v51
    %v55 = vshrl.u32 2475754826, %v52
    %v56 = vor.u32 %v54, %v55
    %v57 = vshll.u32 2475754826, %v51
    %v58 = vshrl.u32 2131351028, %v52
    %v59 = vor.u32 %v57, %v58
    %v60 = vshll.u32 2131351028, %v51
    %v61 = vshrl.u32 2102212464, %v52
    %v62 = vor.u32 %v60, %v61
    %v63 = vshll.u32 2102212464, %v51
    %v64 = vshrl.u32 920167782, %v52
    %v65 = vor.u32 %v63, %v64
    %v66 = vshll.u32 920167782, %v51
    %v67 = vshrl.u32 1326507024, %v52
    %v68 = vor.u32 %v66, %v67
    %vm69 = vcmp.lt.s32.totalorder %v50, 1
    %vm70 = vcmp.lt.s32.totalorder %v50, 2
    %vm71 = vcmp.lt.s32.totalorder %v50, 3
    %vm72 = vcmp.lt.s32.totalorder %v50, 4
    %v73 = vsel %vm69, %v53, %v56
    %v74 = vsel %vm72, %v62, 2102212464
    %v75 = vsel %vm71, %v59, %v74
    %v76 = vsel %vm70, %v73, %v75
    %v77 = vsel %vm69, %v56, %v59
    %v78 = vsel %vm72, %v65, 920167782
    %v79 = vsel %vm71, %v62, %v78
    %v80 = vsel %vm70, %v77, %v79
    %v81 = vsel %vm69, %v59, %v62
    %v82 = vsel %vm72, %v68, 1326507024
    %v83 = vsel %vm71, %v65, %v82
    %v84 = vsel %vm70, %v81, %v83
    %v85 = vshll.u32 %v45, 8
    %v86 = vmul.u32.u64.compose %v85, %v84
    %v87 = vextract.low.u32 %v86
    %v88 = vextract.high.u32 %v86
    %v89 = vmul.u32.u64.compose %v85, %v80
    %v90 = vextract.low.u32 %v89
    %v91 = vextract.high.u32 %v89
    %v92 = vmul.u32 %v85, %v76
    %v93 = vadd.s32 %v88, %v90
    %vm94 = vc.u32 %v88, %v90
    %v95 = vadd.s32 %v91, 1
    %v96 = vsel %vm94, %v95, %v91
    %v97 = vadd.s32 %v92, %v96
    %v98 = vadd.s32 %v97, 536870912
    %v99 = vshrl.u32 %v98, 30
    %v100 = vshll.u32 %v99, 30
    %v101 = vsub.s32 %v97, %v100
    %vm102 = vcmp.lt.s32.totalorder %v101, 0
    %v103 = vsub.s32 0, %v101
    %v104 = vsel %vm102, %v103, %v101
    %v105 = vclz %v104
    %v106 = vsub.s32 %v105, 2
    %vm107 = vcmp.gt.s32.totalorder 0, %v106
    %v108 = vsel %vm107, 0, %v106
    %v109 = vsub.s32 32, %v108
    %v110 = vshll.u32 %v101, %v108
    %v111 = vshrl.u32 %v93, %v109
    %v112 = vor.u32 %v110, %v111
    %v113 = vsub.s32 4294967266, %v108
    %v114 = vadd.s32 %v113, 127
    %v115 = vshll.u32 %v114, 23
    %v116 = vor.u32 4788187, %v115
    %v117 = vand.u32 2147483647, %v116
    %v119 = vcvt.s32.f32 %v112
    %v120 = vmul.f32 %v119, %v117
    %v121 = vxor.u32 %v120, 2147483648
    %v122 = vsel %vm39, %v121, %v120
    %v123 = vsub.s32 4, %v99
    %v124 = vsel %vm39, %v123, %v99
    %v125 = vsel %vm38, %v33, %v122
    %v126 = vsel %vm38, 0, %v124
    %v127 = vcosq.f32.pop %v125
    %v128 = vsinq.f32.pop %v125
    %vm129 = vweird.f32 %v33
    %v130 = vand.u32 %v126, 3
    %vm131 = vcmp.lt.s32.totalorder %v130, 2
    %vm132 = vcmp.eq.s32.totalorder %v130, 0
    %v133 = vxor.u32 %v128, 2147483648
    %v134 = vsel %vm132, %v127, %v133
    %vm135 = vcmp.eq.s32.totalorder %v130, 2
    %v136 = vxor.u32 %v127, 2147483648
    %v137 = vsel %vm135, %v136, %v128
    %v138 = vsel %vm131, %v134, %v137
    %v139 = vsel %vm129, nan, %v138
    %v140 = vand.u32 2147483647, %v33
    %vm141 = vcmp.le.f32.partialorder %v140, 0.7853982
    %vm142 = vcmp.lt.s32.totalorder %v33, 0
    %v143 = vand.u32 %v33, 2139095040
    %v144 = vshrl.u32 %v143, 23
    %v145 = vsub.s32 %v144, 127
    %v146 = vand.u32 2147483647, %v33
    %v147 = vand.u32 %v146, 8388607
    %v148 = vor.u32 %v147, 8388608
    %v149 = vsub.s32 0, %v148
    %v150 = vadd.s32 %v145, 1
    %vm151 = vcmp.gt.s32.totalorder %v150, 0
    %v152 = vsel %vm151, %v150, 0
    %v153 = vshrl.u32 %v152, 5
    %v154 = vand.u32 %v152, 31
    %v155 = vsub.s32 32, %v154
    %v156 = vshrl.u32 683565275, %v155
    %v157 = vshll.u32 683565275, %v154
    %v158 = vshrl.u32 2475754826, %v155
    %v159 = vor.u32 %v157, %v158
    %v160 = vshll.u32 2475754826, %v154
    %v161 = vshrl.u32 2131351028, %v155
    %v162 = vor.u32 %v160, %v161
    %v163 = vshll.u32 2131351028, %v154
    %v164 = vshrl.u32 2102212464, %v155
    %v165 = vor.u32 %v163, %v164
    %v166 = vshll.u32 2102212464, %v154
    %v167 = vshrl.u32 920167782, %v155
    %v168 = vor.u32 %v166, %v167
    %v169 = vshll.u32 920167782, %v154
    %v170 = vshrl.u32 1326507024, %v155
    %v171 = vor.u32 %v169, %v170
    %vm172 = vcmp.lt.s32.totalorder %v153, 1
    %vm173 = vcmp.lt.s32.totalorder %v153, 2
    %vm174 = vcmp.lt.s32.totalorder %v153, 3
    %vm175 = vcmp.lt.s32.totalorder %v153, 4
    %v176 = vsel %vm172, %v156, %v159
    %v177 = vsel %vm175, %v165, 2102212464
    %v178 = vsel %vm174, %v162, %v177
    %v179 = vsel %vm173, %v176, %v178
    %v180 = vsel %vm172, %v159, %v162
    %v181 = vsel %vm175, %v168, 920167782
    %v182 = vsel %vm174, %v165, %v181
    %v183 = vsel %vm173, %v180, %v182
    %v184 = vsel %vm172, %v162, %v165
    %v185 = vsel %vm175, %v171, 1326507024
    %v186 = vsel %vm174, %v168, %v185
    %v187 = vsel %vm173, %v184, %v186
    %v188 = vshll.u32 %v148, 8
    %v189 = vmul.u32.u64.compose %v188, %v187
    %v190 = vextract.low.u32 %v189
    %v191 = vextract.high.u32 %v189
    %v192 = vmul.u32.u64.compose %v188, %v183
    %v193 = vextract.low.u32 %v192
    %v194 = vextract.high.u32 %v192
    %v195 = vmul.u32 %v188, %v179
    %v196 = vadd.s32 %v191, %v193
    %vm197 = vc.u32 %v191, %v193
    %v198 = vadd.s32 %v194, 1
    %v199 = vsel %vm197, %v198, %v194
    %v200 = vadd.s32 %v195, %v199
    %v201 = vadd.s32 %v200, 536870912
    %v202 = vshrl.u32 %v201, 30
    %v203 = vshll.u32 %v202, 30
    %v204 = vsub.s32 %v200, %v203
    %vm205 = vcmp.lt.s32.totalorder %v204, 0
    %v206 = vsub.s32 0, %v204
    %v207 = vsel %vm205, %v206, %v204
    %v208 = vclz %v207
    %v209 = vsub.s32 %v208, 2
    %vm210 = vcmp.gt.s32.totalorder 0, %v209
    %v211 = vsel %vm210, 0, %v209
    %v212 = vsub.s32 32, %v211
    %v213 = vshll.u32 %v204, %v211
    %v214 = vshrl.u32 %v196, %v212
    %v215 = vor.u32 %v213, %v214
    %v216 = vsub.s32 4294967266, %v211
    %v217 = vadd.s32 %v216, 127
    %v218 = vshll.u32 %v217, 23
    %v219 = vor.u32 4788187, %v218
    %v220 = vand.u32 2147483647, %v219
    %v222 = vcvt.s32.f32 %v215
    %v223 = vmul.f32 %v222, %v220
    %v224 = vxor.u32 %v223, 2147483648
    %v225 = vsel %vm142, %v224, %v223
    %v226 = vsub.s32 4, %v202
    %v227 = vsel %vm142, %v226, %v202
    %v228 = vsel %vm141, %v33, %v225
    %v229 = vsel %vm141, 0, %v227
    %v230 = vcosq.f32.pop %v228
    %v231 = vsinq.f32.pop %v228
    %vm232 = vweird.f32 %v33
    %v233 = vadd.s32 %v229, 3
    %v234 = vand.u32 %v233, 3
    %vm235 = vcmp.lt.s32.totalorder %v234, 2
    %vm236 = vcmp.eq.s32.totalorder %v234, 0
    %v237 = vxor.u32 %v231, 2147483648
    %v238 = vsel %vm236, %v230, %v237
    %vm239 = vcmp.eq.s32.totalorder %v234, 2
    %v240 = vxor.u32 %v230, 2147483648
    %v241 = vsel %vm239, %v240, %v231
    %v242 = vsel %vm235, %v238, %v241
    %v243 = vsel %vm232, nan, %v242
    %v244 = vsel %vm36, 1, 0
    %vm245 = vcmp.eq.s32.totalorder %v244, 1
    %v246 = vsel %vm245, %v139, %v243
    %v247 = vld [vmem:[%s0] sm:$0x3]
    %v248 = vld [vmem:[%s1] sm:$0xff]
    %v249 = vld [vmem:[%s1 + $0x8] sm:$0xff]
    %v250 = vld [vmem:[%s1 + $0x10] sm:$0xff]
    %v251 = vld [vmem:[%s1 + $0x18] sm:$0xff]
    %v252 = vld [vmem:[%s1 + $0x20] sm:$0xff]
    %v253 = vld [vmem:[%s1 + $0x28] sm:$0xff]
    %v254 = vld [vmem:[%s1 + $0x30] sm:$0xff]
    %v255 = vld [vmem:[%s1 + $0x38] sm:$0xff]
    %v256 = vld [vmem:[%s1 + $0x40] sm:$0xff]
    %v257 = vld [vmem:[%s1 + $0x48] sm:$0xff]
    %v258 = vld [vmem:[%s1 + $0x50] sm:$0xff]
    %v259 = vld [vmem:[%s1 + $0x58] sm:$0xff]
    %v260 = vld [vmem:[%s1 + $0x60] sm:$0xff]
    %v261 = vld [vmem:[%s1 + $0x68] sm:$0xff]
    %v262 = vld [vmem:[%s1 + $0x70] sm:$0xff]
    %v263 = vld [vmem:[%s1 + $0x78] sm:$0xff]
    %v264 = vld [vmem:[%s1 + $0x80] sm:$0xff]
    %v265 = vld [vmem:[%s1 + $0x88] sm:$0xff]
    %v266 = vld [vmem:[%s1 + $0x90] sm:$0xff]
    %v267 = vld [vmem:[%s1 + $0x98] sm:$0xff]
    %268 = vmatprep.subr.mxu0 0.0
    %269 = vmatpush1.msra.mxu0 %v252
    %270 = vmatprep.subr.mxu0 0.0
    %271 = vmatpush1.msra.mxu0 %v253
    %272 = vmatprep.subr.mxu0 0.0
    %273 = vmatpush1.msra.mxu0 %v254
    %274 = vmatprep.subr.mxu0 0.0
    %275 = vmatpush1.msra.mxu0 %v255
    %276 = vmatprep.subr.mxu0 0.0
    %277 = vmatpush1.msra.mxu0 %v256
    %278 = vmatprep.subr.mxu0 0.0
    %279 = vmatpush1.msra.mxu0 %v257
    %280 = vmatprep.subr.mxu0 0.0
    %281 = vmatpush1.msra.mxu0 %v258
    %282 = vmatprep.subr.mxu0 0.0
    %283 = vmatpush1.msra.mxu0 %v259
    %284 = vmatprep.subr.mxu0 0.0
    %285 = vmatpush1.msra.mxu0 %v260
    %286 = vmatprep.subr.mxu0 0.0
    %287 = vmatpush1.msra.mxu0 %v261
    %288 = vmatprep.subr.mxu0 0.0
    %289 = vmatpush1.msra.mxu0 %v262
    %290 = vmatprep.subr.mxu0 0.0
    %291 = vmatpush1.msra.mxu0 %v263
    %292 = vmatprep.subr.mxu0 0.0
    %293 = vmatpush1.msra.mxu0 %v264
    %294 = vmatprep.subr.mxu0 0.0
    %295 = vmatpush1.msra.mxu0 %v265
    %296 = vmatprep.subr.mxu0 0.0
    %297 = vmatpush1.msra.mxu0 %v266
    %298 = vmatprep.subr.mxu0 0.0
    %299 = vmatpush1.msra.mxu0 %v267
    %300 = vmatprep.subr.mxu0 0.0
    %301 = vmatpush1.msra.mxu0 0.0
    %302 = vmatprep.subr.mxu0 0.0
    %303 = vmatpush1.msra.mxu0 0.0
    %304 = vmatprep.subr.mxu0 0.0
    %305 = vmatpush1.msra.mxu0 0.0
    %306 = vmatprep.subr.mxu0 0.0
    %307 = vmatpush1.msra.mxu0 0.0
    %308 = vmatprep.subr.mxu0 0.0
    %309 = vmatpush1.msra.mxu0 0.0
    %310 = vmatprep.subr.mxu0 0.0
    %311 = vmatpush1.msra.mxu0 0.0
    %312 = vmatprep.subr.mxu0 0.0
    %313 = vmatpush1.msra.mxu0 0.0
    %314 = vmatprep.subr.mxu0 0.0
    %315 = vmatpush1.msra.mxu0 0.0
    %316 = vmatprep.subr.mxu0 0.0
    %317 = vmatpush1.msra.mxu0 0.0
    %318 = vmatprep.subr.mxu0 0.0
    %319 = vmatpush1.msra.mxu0 0.0
    %320 = vmatprep.subr.mxu0 0.0
    %321 = vmatpush1.msra.mxu0 0.0
    %322 = vmatprep.subr.mxu0 0.0
    %323 = vmatpush1.msra.mxu0 0.0
    %324 = vmatprep.subr.mxu0 0.0
    %325 = vmatpush1.msra.mxu0 0.0
    %326 = vmatprep.subr.mxu0 0.0
    %327 = vmatpush1.msra.mxu0 0.0
    %328 = vmatprep.subr.mxu0 0.0
    %329 = vmatpush1.msra.mxu0 0.0
    %330 = vmatprep.subr.mxu0 0.0
    %331 = vmatpush1.msra.mxu0 0.0
    %332 = vmatprep.mubr.f32.mxu0 0.0
    %333 = vmatmul.mubr.f32.gmra.mrb[0].mxu0 %v247
    %v334 = vpop.f32.mrb[0].mxu0
    %v335 = vadd.f32 0.0, %v334
    %v336 = vpop.f32.mrb[0].mxu0
    %337 = vdwg.mxu0
    %vm338 = vcmask 261120
    %v340 = vsel %vm338, %v246, 0
    %342 = vmatprep.subr.mxu0 0.0
    %343 = vmatpush1.msra.mxu0 %v248
    %344 = vmatprep.subr.mxu0 0.0
    %345 = vmatpush1.msra.mxu0 %v249
    %346 = vmatprep.subr.mxu0 0.0
    %347 = vmatpush1.msra.mxu0 %v250
    %348 = vmatprep.subr.mxu0 0.0
    %349 = vmatpush1.msra.mxu0 %v251
    %350 = vmatprep.subr.mxu0 0.0
    %351 = vmatpush1.msra.mxu0 0.0
    %352 = vmatprep.subr.mxu0 0.0
    %353 = vmatpush1.msra.mxu0 0.0
    %354 = vmatprep.subr.mxu0 0.0
    %355 = vmatpush1.msra.mxu0 0.0
    %356 = vmatprep.subr.mxu0 0.0
    %357 = vmatpush1.msra.mxu0 0.0
    %358 = vmatprep.subr.mxu0 0.0
    %359 = vmatpush1.msra.mxu0 0.0
    %360 = vmatprep.subr.mxu0 0.0
    %361 = vmatpush1.msra.mxu0 0.0
    %362 = vmatprep.subr.mxu0 0.0
    %363 = vmatpush1.msra.mxu0 0.0
    %364 = vmatprep.subr.mxu0 0.0
    %365 = vmatpush1.msra.mxu0 0.0
    %366 = vmatprep.subr.mxu0 0.0
    %367 = vmatpush1.msra.mxu0 0.0
    %368 = vmatprep.subr.mxu0 0.0
    %369 = vmatpush1.msra.mxu0 0.0
    %370 = vmatprep.subr.mxu0 0.0
    %371 = vmatpush1.msra.mxu0 0.0
    %372 = vmatprep.subr.mxu0 0.0
    %373 = vmatpush1.msra.mxu0 0.0
    %374 = vmatprep.subr.mxu0 0.0
    %375 = vmatpush1.msra.mxu0 0.0
    %376 = vmatprep.subr.mxu0 0.0
    %377 = vmatpush1.msra.mxu0 0.0
    %378 = vmatprep.subr.mxu0 0.0
    %379 = vmatpush1.msra.mxu0 0.0
    %380 = vmatprep.subr.mxu0 0.0
    %381 = vmatpush1.msra.mxu0 0.0
    %382 = vmatprep.subr.mxu0 0.0
    %383 = vmatpush1.msra.mxu0 0.0
    %384 = vmatprep.subr.mxu0 0.0
    %385 = vmatpush1.msra.mxu0 0.0
    %386 = vmatprep.subr.mxu0 0.0
    %387 = vmatpush1.msra.mxu0 0.0
    %388 = vmatprep.subr.mxu0 0.0
    %389 = vmatpush1.msra.mxu0 0.0
    %390 = vmatprep.subr.mxu0 0.0
    %391 = vmatpush1.msra.mxu0 0.0
    %392 = vmatprep.subr.mxu0 0.0
    %393 = vmatpush1.msra.mxu0 0.0
    %394 = vmatprep.subr.mxu0 0.0
    %395 = vmatpush1.msra.mxu0 0.0
    %396 = vmatprep.subr.mxu0 0.0
    %397 = vmatpush1.msra.mxu0 0.0
    %398 = vmatprep.subr.mxu0 0.0
    %399 = vmatpush1.msra.mxu0 0.0
    %400 = vmatprep.subr.mxu0 0.0
    %401 = vmatpush1.msra.mxu0 0.0
    %402 = vmatprep.subr.mxu0 0.0
    %403 = vmatpush1.msra.mxu0 0.0
    %404 = vmatprep.subr.mxu0 0.0
    %405 = vmatpush1.msra.mxu0 0.0
    %406 = vmatprep.mubr.f32.mxu0 0.0
    %407 = vmatmul.mubr.f32.gmra.mrb[0].mxu0 %v340
    %v408 = vpop.f32.mrb[0].mxu0
    %v409 = vadd.f32 %v335, %v408
    %v410 = vpop.f32.mrb[0].mxu0
    %411 = vdwg.mxu0
    %v412 = vld [vmem:[%s1 + $0xa0] sm:$0x1]
    %v413 = vlaneseq
    %v414 = vshrl.u32 %v413, 7
    %v415 = vsub.s32 0, %v414
    %v416 = vrot.slane %v412, %v415
    %v417 = vadd.f32 %v409, %v416
    %v418 = vxor.u32 %v417, 2147483648
    %v419 = vmul.f32 %v418, 1.442695
    %v420 = vpow.pop %v419
    %v421 = vadd.f32 %v420, 1.0
    %v422 = vrcp.pop %v421
    %v423 = vmul.f32 1.0, %v422
    %v424 = vmul.f32 %v417, %v423
    %v425 = vld [vmem:[%s1 + $0xa8] sm:$0xff]
    %v426 = vld [vmem:[%s1 + $0xb0] sm:$0xff]
    %v427 = vld [vmem:[%s1 + $0xb8] sm:$0xff]
    %v428 = vld [vmem:[%s1 + $0xc0] sm:$0xff]
    %v429 = vld [vmem:[%s1 + $0xc8] sm:$0xff]
    %v430 = vld [vmem:[%s1 + $0xd0] sm:$0xff]
    %v431 = vld [vmem:[%s1 + $0xd8] sm:$0xff]
    %v432 = vld [vmem:[%s1 + $0xe0] sm:$0xff]
    %v433 = vld [vmem:[%s1 + $0xe8] sm:$0x1]
    %v434 = vlaneseq
    %v435 = vshrl.u32 %v434, 7
    %v436 = vsub.s32 0, %v435
    %v437 = vrot.slane %v433, %v436
    %vm438 = vcmask 523264
    %v440 = vsel %vm438, %v424, 0
    %442 = vmatprep.subr.mxu0 0.0
    %443 = vmatpush1.msra.mxu0 %v425
    %444 = vmatprep.subr.mxu0 0.0
    %445 = vmatpush1.msra.mxu0 %v426
    %446 = vmatprep.subr.mxu0 0.0
    %447 = vmatpush1.msra.mxu0 %v427
    %448 = vmatprep.subr.mxu0 0.0
    %449 = vmatpush1.msra.mxu0 %v428
    %450 = vmatprep.subr.mxu0 0.0
    %451 = vmatpush1.msra.mxu0 %v429
    %452 = vmatprep.subr.mxu0 0.0
    %453 = vmatpush1.msra.mxu0 %v430
    %454 = vmatprep.subr.mxu0 0.0
    %455 = vmatpush1.msra.mxu0 %v431
    %456 = vmatprep.subr.mxu0 0.0
    %457 = vmatpush1.msra.mxu0 %v432
    %458 = vmatprep.subr.mxu0 0.0
    %459 = vmatpush1.msra.mxu0 0.0
    %460 = vmatprep.subr.mxu0 0.0
    %461 = vmatpush1.msra.mxu0 0.0
    %462 = vmatprep.subr.mxu0 0.0
    %463 = vmatpush1.msra.mxu0 0.0
    %464 = vmatprep.subr.mxu0 0.0
    %465 = vmatpush1.msra.mxu0 0.0
    %466 = vmatprep.subr.mxu0 0.0
    %467 = vmatpush1.msra.mxu0 0.0
    %468 = vmatprep.subr.mxu0 0.0
    %469 = vmatpush1.msra.mxu0 0.0
    %470 = vmatprep.subr.mxu0 0.0
    %471 = vmatpush1.msra.mxu0 0.0
    %472 = vmatprep.subr.mxu0 0.0
    %473 = vmatpush1.msra.mxu0 0.0
    %474 = vmatprep.subr.mxu0 0.0
    %475 = vmatpush1.msra.mxu0 0.0
    %476 = vmatprep.subr.mxu0 0.0
    %477 = vmatpush1.msra.mxu0 0.0
    %478 = vmatprep.subr.mxu0 0.0
    %479 = vmatpush1.msra.mxu0 0.0
    %480 = vmatprep.subr.mxu0 0.0
    %481 = vmatpush1.msra.mxu0 0.0
    %482 = vmatprep.subr.mxu0 0.0
    %483 = vmatpush1.msra.mxu0 0.0
    %484 = vmatprep.subr.mxu0 0.0
    %485 = vmatpush1.msra.mxu0 0.0
    %486 = vmatprep.subr.mxu0 0.0
    %487 = vmatpush1.msra.mxu0 0.0
    %488 = vmatprep.subr.mxu0 0.0
    %489 = vmatpush1.msra.mxu0 0.0
    %490 = vmatprep.subr.mxu0 0.0
    %491 = vmatpush1.msra.mxu0 0.0
    %492 = vmatprep.subr.mxu0 0.0
    %493 = vmatpush1.msra.mxu0 0.0
    %494 = vmatprep.subr.mxu0 0.0
    %495 = vmatpush1.msra.mxu0 0.0
    %496 = vmatprep.subr.mxu0 0.0
    %497 = vmatpush1.msra.mxu0 0.0
    %498 = vmatprep.subr.mxu0 0.0
    %499 = vmatpush1.msra.mxu0 0.0
    %500 = vmatprep.subr.mxu0 0.0
    %501 = vmatpush1.msra.mxu0 0.0
    %502 = vmatprep.subr.mxu0 0.0
    %503 = vmatpush1.msra.mxu0 0.0
    %504 = vmatprep.subr.mxu0 0.0
    %505 = vmatpush1.msra.mxu0 0.0
    %506 = vmatprep.mubr.f32.mxu0 0.0
    %507 = vmatmul.mubr.f32.gmra.mrb[0].mxu0 %v440
    %v508 = vpop.f32.mrb[0].mxu0
    %v509 = vadd.f32 %v437, %v508
    %v510 = vpop.f32.mrb[0].mxu0
    %511 = vdwg.mxu0
    %v512 = vxor.u32 %v509, 2147483648
    %v513 = vmul.f32 %v512, 1.442695
    %v514 = vpow.pop %v513
    %v515 = vadd.f32 %v514, 1.0
    %v516 = vrcp.pop %v515
    %v517 = vmul.f32 1.0, %v516
    %v518 = vmul.f32 %v509, %v517
    %v519 = vld [vmem:[%s1 + $0xf0] sm:$0xff]
    %v520 = vld [vmem:[%s1 + $0xf8] sm:$0xff]
    %v521 = vld [vmem:[%s1 + $0x100] sm:$0xff]
    %v522 = vld [vmem:[%s1 + $0x108] sm:$0xff]
    %v523 = vld [vmem:[%s1 + $0x110] sm:$0xff]
    %v524 = vld [vmem:[%s1 + $0x118] sm:$0xff]
    %v525 = vld [vmem:[%s1 + $0x120] sm:$0xff]
    %v526 = vld [vmem:[%s1 + $0x128] sm:$0xff]
    %v527 = vld [vmem:[%s1 + $0x130] sm:$0x1]
    %v528 = vlaneseq
    %v529 = vshrl.u32 %v528, 7
    %v530 = vsub.s32 0, %v529
    %v531 = vrot.slane %v527, %v530
    %v533 = vsel %vm438, %v518, 0
    %535 = vmatprep.subr.mxu0 0.0
    %536 = vmatpush1.msra.mxu0 %v519
    %537 = vmatprep.subr.mxu0 0.0
    %538 = vmatpush1.msra.mxu0 %v520
    %539 = vmatprep.subr.mxu0 0.0
    %540 = vmatpush1.msra.mxu0 %v521
    %541 = vmatprep.subr.mxu0 0.0
    %542 = vmatpush1.msra.mxu0 %v522
    %543 = vmatprep.subr.mxu0 0.0
    %544 = vmatpush1.msra.mxu0 %v523
    %545 = vmatprep.subr.mxu0 0.0
    %546 = vmatpush1.msra.mxu0 %v524
    %547 = vmatprep.subr.mxu0 0.0
    %548 = vmatpush1.msra.mxu0 %v525
    %549 = vmatprep.subr.mxu0 0.0
    %550 = vmatpush1.msra.mxu0 %v526
    %551 = vmatprep.subr.mxu0 0.0
    %552 = vmatpush1.msra.mxu0 0.0
    %553 = vmatprep.subr.mxu0 0.0
    %554 = vmatpush1.msra.mxu0 0.0
    %555 = vmatprep.subr.mxu0 0.0
    %556 = vmatpush1.msra.mxu0 0.0
    %557 = vmatprep.subr.mxu0 0.0
    %558 = vmatpush1.msra.mxu0 0.0
    %559 = vmatprep.subr.mxu0 0.0
    %560 = vmatpush1.msra.mxu0 0.0
    %561 = vmatprep.subr.mxu0 0.0
    %562 = vmatpush1.msra.mxu0 0.0
    %563 = vmatprep.subr.mxu0 0.0
    %564 = vmatpush1.msra.mxu0 0.0
    %565 = vmatprep.subr.mxu0 0.0
    %566 = vmatpush1.msra.mxu0 0.0
    %567 = vmatprep.subr.mxu0 0.0
    %568 = vmatpush1.msra.mxu0 0.0
    %569 = vmatprep.subr.mxu0 0.0
    %570 = vmatpush1.msra.mxu0 0.0
    %571 = vmatprep.subr.mxu0 0.0
    %572 = vmatpush1.msra.mxu0 0.0
    %573 = vmatprep.subr.mxu0 0.0
    %574 = vmatpush1.msra.mxu0 0.0
    %575 = vmatprep.subr.mxu0 0.0
    %576 = vmatpush1.msra.mxu0 0.0
    %577 = vmatprep.subr.mxu0 0.0
    %578 = vmatpush1.msra.mxu0 0.0
    %579 = vmatprep.subr.mxu0 0.0
    %580 = vmatpush1.msra.mxu0 0.0
    %581 = vmatprep.subr.mxu0 0.0
    %582 = vmatpush1.msra.mxu0 0.0
    %583 = vmatprep.subr.mxu0 0.0
    %584 = vmatpush1.msra.mxu0 0.0
    %585 = vmatprep.subr.mxu0 0.0
    %586 = vmatpush1.msra.mxu0 0.0
    %587 = vmatprep.subr.mxu0 0.0
    %588 = vmatpush1.msra.mxu0 0.0
    %589 = vmatprep.subr.mxu0 0.0
    %590 = vmatpush1.msra.mxu0 0.0
    %591 = vmatprep.subr.mxu0 0.0
    %592 = vmatpush1.msra.mxu0 0.0
    %593 = vmatprep.subr.mxu0 0.0
    %594 = vmatpush1.msra.mxu0 0.0
    %595 = vmatprep.subr.mxu0 0.0
    %596 = vmatpush1.msra.mxu0 0.0
    %597 = vmatprep.subr.mxu0 0.0
    %598 = vmatpush1.msra.mxu0 0.0
    %599 = vmatprep.mubr.f32.mxu0 0.0
    %600 = vmatmul.mubr.f32.gmra.mrb[0].mxu0 %v533
    %v601 = vpop.f32.mrb[0].mxu0
    %v602 = vadd.f32 %v531, %v601
    %v603 = vpop.f32.mrb[0].mxu0
    %604 = vdwg.mxu0
    %v605 = vxor.u32 %v602, 2147483648
    %v606 = vmul.f32 %v605, 1.442695
    %v607 = vpow.pop %v606
    %v608 = vadd.f32 %v607, 1.0
    %v609 = vrcp.pop %v608
    %v610 = vmul.f32 1.0, %v609
    %v611 = vmul.f32 %v602, %v610
    %v612 = vld [vmem:[%s2] sm:$0xff]
    %v613 = vld [vmem:[%s2 + $0x8] sm:$0xff]
    %v614 = vld [vmem:[%s2 + $0x10] sm:$0xff]
    %v615 = vld [vmem:[%s2 + $0x18] sm:$0xff]
    %v616 = vld [vmem:[%s2 + $0x20] sm:$0xff]
    %v617 = vld [vmem:[%s2 + $0x28] sm:$0xff]
    %v618 = vld [vmem:[%s2 + $0x30] sm:$0xff]
    %v619 = vld [vmem:[%s2 + $0x38] sm:$0xff]
    %v620 = vld [vmem:[%s2 + $0x40] sm:$0xff]
    %v621 = vld [vmem:[%s2 + $0x48] sm:$0xff]
    %v622 = vld [vmem:[%s2 + $0x50] sm:$0xff]
    %v623 = vld [vmem:[%s2 + $0x58] sm:$0xff]
    %v624 = vld [vmem:[%s2 + $0x60] sm:$0xff]
    %v625 = vld [vmem:[%s2 + $0x68] sm:$0xff]
    %v626 = vld [vmem:[%s2 + $0x70] sm:$0xff]
    %v627 = vld [vmem:[%s2 + $0x78] sm:$0xff]
    %v628 = vld [vmem:[%s2 + $0x80] sm:$0xff]
    %v629 = vld [vmem:[%s2 + $0x88] sm:$0xff]
    %v630 = vld [vmem:[%s2 + $0x90] sm:$0xff]
    %v631 = vld [vmem:[%s2 + $0x98] sm:$0xff]
    %v632 = vld [vmem:[%s2 + $0xa0] sm:$0xff]
    %v633 = vld [vmem:[%s2 + $0xa8] sm:$0xff]
    %v634 = vld [vmem:[%s2 + $0xb0] sm:$0xff]
    %v635 = vld [vmem:[%s2 + $0xb8] sm:$0xff]
    %v636 = vld [vmem:[%s2 + $0xc0] sm:$0xff]
    %v637 = vld [vmem:[%s2 + $0xc8] sm:$0xff]
    %v638 = vld [vmem:[%s2 + $0xd0] sm:$0xff]
    %v639 = vld [vmem:[%s2 + $0xd8] sm:$0xff]
    %v640 = vld [vmem:[%s2 + $0xe0] sm:$0xff]
    %v641 = vld [vmem:[%s2 + $0xe8] sm:$0xff]
    %v642 = vld [vmem:[%s2 + $0xf0] sm:$0xff]
    %v643 = vld [vmem:[%s2 + $0xf8] sm:$0xff]
    %s644 = scalar_lea.vmem %s2, 256
    %v645 = vld [vmem:[%s644] ss:$8 sm:$0xf]
    %v647 = vlaneseq
    %v648 = vshrl.u32 %v647, 7
    %v649 = vsub.s32 0, %v648
    %v650 = vrot.slane %v645, %v649
    %v651 = vlaneseq
    %v652 = vshrl.u32 %v651, 7
    %v653 = vsub.s32 1, %v652
    %v654 = vrot.slane %v645, %v653
    %v655 = vlaneseq
    %v656 = vshrl.u32 %v655, 7
    %v657 = vsub.s32 2, %v656
    %v658 = vrot.slane %v645, %v657
    %v659 = vlaneseq
    %v660 = vshrl.u32 %v659, 7
    %v661 = vsub.s32 3, %v660
    %v662 = vrot.slane %v645, %v661
    %v668 = vsel %vm438, %v611, 0
    %670 = vmatprep.subr.mxu0 %v613
    %671 = vmatpush1.msra.mxu0 %v612
    %672 = vmatprep.subr.mxu0 %v617
    %673 = vmatpush1.msra.mxu0 %v616
    %674 = vmatprep.subr.mxu0 %v621
    %675 = vmatpush1.msra.mxu0 %v620
    %676 = vmatprep.subr.mxu0 %v625
    %677 = vmatpush1.msra.mxu0 %v624
    %678 = vmatprep.subr.mxu0 %v629
    %679 = vmatpush1.msra.mxu0 %v628
    %680 = vmatprep.subr.mxu0 %v633
    %681 = vmatpush1.msra.mxu0 %v632
    %682 = vmatprep.subr.mxu0 %v637
    %683 = vmatpush1.msra.mxu0 %v636
    %684 = vmatprep.subr.mxu0 %v641
    %685 = vmatpush1.msra.mxu0 %v640
    %686 = vmatprep.subr.mxu0 0.0
    %687 = vmatpush1.msra.mxu0 0.0
    %688 = vmatprep.subr.mxu0 0.0
    %689 = vmatpush1.msra.mxu0 0.0
    %690 = vmatprep.subr.mxu0 0.0
    %691 = vmatpush1.msra.mxu0 0.0
    %692 = vmatprep.subr.mxu0 0.0
    %693 = vmatpush1.msra.mxu0 0.0
    %694 = vmatprep.subr.mxu0 0.0
    %695 = vmatpush1.msra.mxu0 0.0
    %696 = vmatprep.subr.mxu0 0.0
    %697 = vmatpush1.msra.mxu0 0.0
    %698 = vmatprep.subr.mxu0 0.0
    %699 = vmatpush1.msra.mxu0 0.0
    %700 = vmatprep.subr.mxu0 0.0
    %701 = vmatpush1.msra.mxu0 0.0
    %702 = vmatprep.subr.mxu0 0.0
    %703 = vmatpush1.msra.mxu0 0.0
    %704 = vmatprep.subr.mxu0 0.0
    %705 = vmatpush1.msra.mxu0 0.0
    %706 = vmatprep.subr.mxu0 0.0
    %707 = vmatpush1.msra.mxu0 0.0
    %708 = vmatprep.subr.mxu0 0.0
    %709 = vmatpush1.msra.mxu0 0.0
    %710 = vmatprep.subr.mxu0 0.0
    %711 = vmatpush1.msra.mxu0 0.0
    %712 = vmatprep.subr.mxu0 0.0
    %713 = vmatpush1.msra.mxu0 0.0
    %714 = vmatprep.subr.mxu0 0.0
    %715 = vmatpush1.msra.mxu0 0.0
    %716 = vmatprep.subr.mxu0 0.0
    %717 = vmatpush1.msra.mxu0 0.0
    %718 = vmatprep.subr.mxu0 0.0
    %719 = vmatpush1.msra.mxu0 0.0
    %720 = vmatprep.subr.mxu0 0.0
    %721 = vmatpush1.msra.mxu0 0.0
    %722 = vmatprep.subr.mxu0 0.0
    %723 = vmatpush1.msra.mxu0 0.0
    %724 = vmatprep.subr.mxu0 0.0
    %725 = vmatpush1.msra.mxu0 0.0
    %726 = vmatprep.subr.mxu0 0.0
    %727 = vmatpush1.msra.mxu0 0.0
    %728 = vmatprep.subr.mxu0 0.0
    %729 = vmatpush1.msra.mxu0 0.0
    %730 = vmatprep.subr.mxu0 0.0
    %731 = vmatpush1.msra.mxu0 0.0
    %732 = vmatprep.subr.mxu0 0.0
    %733 = vmatpush1.msra.mxu0 0.0
    %734 = vmatprep.mubr.f32.mxu0 0.0
    %735 = vmatmul.mubr.f32.gmra.mrb[0].mxu0 %v668
    %v736 = vpop.f32.mrb[0].mxu0
    %v737 = vadd.f32 %v650, %v736
    %v738 = vpop.f32.mrb[0].mxu0
    %v739 = vadd.f32 %v654, %v738
    %740 = vdwg.mxu0
    %741 = vmatprep.subr.mxu0 %v615
    %742 = vmatpush1.msra.mxu0 %v614
    %743 = vmatprep.subr.mxu0 %v619
    %744 = vmatpush1.msra.mxu0 %v618
    %745 = vmatprep.subr.mxu0 %v623
    %746 = vmatpush1.msra.mxu0 %v622
    %747 = vmatprep.subr.mxu0 %v627
    %748 = vmatpush1.msra.mxu0 %v626
    %749 = vmatprep.subr.mxu0 %v631
    %750 = vmatpush1.msra.mxu0 %v630
    %751 = vmatprep.subr.mxu0 %v635
    %752 = vmatpush1.msra.mxu0 %v634
    %753 = vmatprep.subr.mxu0 %v639
    %754 = vmatpush1.msra.mxu0 %v638
    %755 = vmatprep.subr.mxu0 %v643
    %756 = vmatpush1.msra.mxu0 %v642
    %757 = vmatprep.subr.mxu0 0.0
    %758 = vmatpush1.msra.mxu0 0.0
    %759 = vmatprep.subr.mxu0 0.0
    %760 = vmatpush1.msra.mxu0 0.0
    %761 = vmatprep.subr.mxu0 0.0
    %762 = vmatpush1.msra.mxu0 0.0
    %763 = vmatprep.subr.mxu0 0.0
    %764 = vmatpush1.msra.mxu0 0.0
    %765 = vmatprep.subr.mxu0 0.0
    %766 = vmatpush1.msra.mxu0 0.0
    %767 = vmatprep.subr.mxu0 0.0
    %768 = vmatpush1.msra.mxu0 0.0
    %769 = vmatprep.subr.mxu0 0.0
    %770 = vmatpush1.msra.mxu0 0.0
    %771 = vmatprep.subr.mxu0 0.0
    %772 = vmatpush1.msra.mxu0 0.0
    %773 = vmatprep.subr.mxu0 0.0
    %774 = vmatpush1.msra.mxu0 0.0
    %775 = vmatprep.subr.mxu0 0.0
    %776 = vmatpush1.msra.mxu0 0.0
    %777 = vmatprep.subr.mxu0 0.0
    %778 = vmatpush1.msra.mxu0 0.0
    %779 = vmatprep.subr.mxu0 0.0
    %780 = vmatpush1.msra.mxu0 0.0
    %781 = vmatprep.subr.mxu0 0.0
    %782 = vmatpush1.msra.mxu0 0.0
    %783 = vmatprep.subr.mxu0 0.0
    %784 = vmatpush1.msra.mxu0 0.0
    %785 = vmatprep.subr.mxu0 0.0
    %786 = vmatpush1.msra.mxu0 0.0
    %787 = vmatprep.subr.mxu0 0.0
    %788 = vmatpush1.msra.mxu0 0.0
    %789 = vmatprep.subr.mxu0 0.0
    %790 = vmatpush1.msra.mxu0 0.0
    %791 = vmatprep.subr.mxu0 0.0
    %792 = vmatpush1.msra.mxu0 0.0
    %793 = vmatprep.subr.mxu0 0.0
    %794 = vmatpush1.msra.mxu0 0.0
    %795 = vmatprep.subr.mxu0 0.0
    %796 = vmatpush1.msra.mxu0 0.0
    %797 = vmatprep.subr.mxu0 0.0
    %798 = vmatpush1.msra.mxu0 0.0
    %799 = vmatprep.subr.mxu0 0.0
    %800 = vmatpush1.msra.mxu0 0.0
    %801 = vmatprep.subr.mxu0 0.0
    %802 = vmatpush1.msra.mxu0 0.0
    %803 = vmatprep.subr.mxu0 0.0
    %804 = vmatpush1.msra.mxu0 0.0
    %805 = vmatprep.mubr.f32.mxu0 0.0
    %806 = vmatmul.mubr.f32.gmra.mrb[0].mxu0 %v668
    %v807 = vpop.f32.mrb[0].mxu0
    %v808 = vadd.f32 %v658, %v807
    %v809 = vpop.f32.mrb[0].mxu0
    %v810 = vadd.f32 %v662, %v809
    %811 = vdwg.mxu0
    %v812 = vadd.s32 %v35, 128
    %v813 = vadd.s32 %v35, 256
    %v814 = vadd.s32 %v35, 384
    %vm815 = vcmp.ge.s32.totalorder %v35, 256
    %vm816 = vcmp.ge.s32.totalorder %v812, 256
    %vm817 = vcmp.ge.s32.totalorder %v813, 256
    %vm818 = vcmp.ge.s32.totalorder %v814, 256
    %vm819 = vcmp.lt.s32.totalorder %v35, 264
    %vm820 = vcmp.lt.s32.totalorder %v812, 264
    %vm821 = vcmp.lt.s32.totalorder %v813, 264
    %vm822 = vcmp.lt.s32.totalorder %v814, 264
    %vm823 = vmand %vm815, %vm819
    %vm824 = vmand %vm816, %vm820
    %vm825 = vmand %vm817, %vm821
    %vm826 = vmand %vm818, %vm822
    %v827 = vsel %vm823, 1, 0
    %v828 = vsel %vm824, 1, 0
    %v829 = vsel %vm825, 1, 0
    %v830 = vsel %vm826, 1, 0
    %vm831 = vcmp.eq.s32.totalorder %v827, 1
    %vm832 = vcmp.eq.s32.totalorder %v828, 1
    %vm833 = vcmp.eq.s32.totalorder %v829, 1
    %vm834 = vcmp.eq.s32.totalorder %v830, 1
    %v835 = vsel %vm831, %v737, -inf
    %v836 = vsel %vm832, %v739, -inf
    %v837 = vsel %vm833, %v808, -inf
    %v838 = vsel %vm834, %v810, -inf
    %vm839 = vcmask 1041408
    %v840 = vsel %vm839, %v835, -inf
    %v841 = vsel %vm839, %v836, -inf
    %v842 = vsel %vm839, %v837, -inf
    %v843 = vsel %vm839, %v838, -inf
    %v844 = vmax.f32 %v840, %v841
    %v845 = vmax.f32 %v842, %v843
    %v846 = vmax.f32 %v844, %v845
    %847 = vmax.xlane.f32.xlu0 %v846
    %v848 = vpop.xlane.xlu0 %847
    %v849 = vsub.f32 %v835, %v848
    %v850 = vsub.f32 %v836, %v848
    %v851 = vsub.f32 %v837, %v848
    %v852 = vsub.f32 %v838, %v848
    %v853 = vmul.f32 %v849, 1.442695
    %v854 = vpow.pop %v853
    %v855 = vmul.f32 %v850, 1.442695
    %v856 = vpow.pop %v855
    %v857 = vmul.f32 %v851, 1.442695
    %v858 = vpow.pop %v857
    %v859 = vmul.f32 %v852, 1.442695
    %v860 = vpow.pop %v859
    %v861 = vsel %vm839, %v854, 0.0
    %v862 = vsel %vm839, %v856, 0.0
    %v863 = vadd.f32 %v861, %v862
    %v864 = vsel %vm839, %v858, 0.0
    %v865 = vadd.f32 %v863, %v864
    %v866 = vsel %vm839, %v860, 0.0
    %v867 = vadd.f32 %v865, %v866
    %868 = vadd.xlane.f32.xlu0 %v867
    %v869 = vpop.xlane.xlu0 %868
    %v870 = vsub.f32 %v737, %v848
    %v871 = vsub.f32 %v739, %v848
    %v872 = vsub.f32 %v808, %v848
    %v873 = vsub.f32 %v810, %v848
    %v874 = vlog2.pop %v869
    %v875 = vmul.f32 %v874, 0.6931472
    %v876 = vsub.f32 %v870, %v875
    %v877 = vsub.f32 %v871, %v875
    %v878 = vsub.f32 %v872, %v875
    %v879 = vsub.f32 %v873, %v875
    %v880 = vsel %vm831, %v876, %v737
    %v881 = vsel %vm832, %v877, %v739
    %v882 = vsel %vm833, %v878, %v808
    %v883 = vsel %vm834, %v879, %v810
    %v888 = vcombine.low %v880, %v881
    %v889 = vcombine.low %v882, %v883
    %v891 = vunpack.c.l.s4 1983009808
    %v892 = vunpack.c.0.s8 %v891
    %v893 = vlaneseq
    %v894 = vshrl.u32 %v893, 7
    %v895 = vsub.s32 %v892, %v894
    %v896 = vrot.slane %v888, %v895
    %v898 = vunpack.c.l.s4 1983009808
    %v899 = vunpack.c.0.s8 %v898
    %v900 = vlaneseq
    %v901 = vshrl.u32 %v900, 7
    %v902 = vsub.s32 %v899, %v901
    %v903 = vrot.slane %v889, %v902
    %v904 = vcombine.low %v896, %v903
    %906 = vst [vmem:[#allocation2] sm:$0xff] %v904
    // Predicated region
    $region14: #{tpu_custom_call.1} parent=1 // pred_check
      _
    $region15: #{tpu_custom_call.1} parent=1 // pred_check_branch
      %908 = sbr.rel (0) target = $region17
    $region16: #{tpu_custom_call.1} parent=1 // pred_region
      %s910 = ssub.s32 128, 128
      %911 = vsyncadd [#allocation3], %s910
      %s913 = sshll.u32 [#allocation2], 4
      %s914 = int_to_ptr.vmem [resolvable:$true] %s913
      %916 = dma.vmem_to_hbm [thread:$0]  %s914, 128, %s3, [#allocation3]
    $region17: #{tpu_custom_call.1} parent=1 // pred_fallthru
      _
    // Predicated region
    $region18: #{tpu_custom_call.1} parent=1 // pred_check
      _
    $region19: #{tpu_custom_call.1} parent=1 // pred_check_branch
      %918 = sbr.rel (0) target = $region21
    $region20: #{tpu_custom_call.1} parent=1 // pred_region
      %919 = dma.done [#allocation3], 128
    $region21: #{tpu_custom_call.1} parent=1 // pred_fallthru
      _
    %920 = vsyncpa [#allocation3], 1

</llo_original>
